<compile_context>
chip_gen: v7x
topology: tpu7x:2x2x1
jax: 0.10.0
libtpu: 0.0.40
codegen_flags: <defaults>
</compile_context>

<pallas_src>
import functools

import jax
import jax.numpy as jnp
from jax.experimental import pallas as pl
from jax.experimental.pallas import tpu as pltpu


def _round_up(v, m):
    return (v + m - 1) // m * m


_HAS_BUFFERED = hasattr(pl, "Buffered")


def _block_spec(shape, index_map, *, buffers=None):
    """pl.BlockSpec with an optional pipeline-depth hint.

    buffers=1 marks blocks whose index_map is constant (resident in VMEM, so
    double-buffering them only wastes VMEM); buffers=3 deepens pipelining of
    the dominant adjacency stream.  If this Pallas version does not accept
    pipeline_mode the hint is dropped (and the caller also retries the whole
    pallas_call without hints if the TPU lowering rejects them).
    """
    if buffers is not None and _HAS_BUFFERED:
        try:
            return pl.BlockSpec(shape, index_map, pipeline_mode=pl.Buffered(buffers))
        except (TypeError, ValueError):
            pass
    return pl.BlockSpec(shape, index_map)


def _default_vmem_limit_bytes():
    # Size the scoped VMEM limit per generation (v5e/v6e: 128 MiB physical,
    # v7x: 64 MiB per TC); leave headroom for the compiler.
    try:
        info = pltpu.get_tpu_info()
        return min(int(info.vmem_capacity_bytes) * 3 // 4, 128 * 1024 * 1024)
    except Exception:
        return 64 * 1024 * 1024


def _choose_tiles(n):
    """Pick (block_q, block_k, n_pad) minimising padded ghost rows.

    block_q is a multiple of 32 (int8 sublane packing of the adjacency tile);
    block_k a multiple of 128 (lane-dense adjacency / f2 tiles) chosen among
    divisors of n_pad so every DMA is large (>=128-wide, ideally >=256 KiB).
    """
    if n <= 256:
        block_q = _round_up(n, 32)                 # minimal padding for small N
    else:
        block_q = min((128, 256), key=lambda b: (_round_up(n, b), -b))
    n_pad = _round_up(n, block_q)
    if n_pad <= 1024:
        block_k = n_pad                            # single key tile, full dim
    else:
        block_k = next(c for c in (1024, 512, 384, 256, 128) if n_pad % c == 0)
    return block_q, block_k, n_pad


# ---------------------------------------------------------------------------
# Pass 1: projection h = x @ W (bf16 operands, f32 accumulation) and the fused
# attention-vector products f = h @ [a1 | a2] -> (TQ, 2).
# ---------------------------------------------------------------------------
def _gat_project_kernel(x_ref, w_ref, a12_ref, h_ref, f_ref):
    h = jnp.dot(
        x_ref[...].astype(jnp.bfloat16),
        w_ref[...],  # already bf16
        preferred_element_type=jnp.float32,
    )  # (TQ, D_pad) f32
    # One fused MXU product instead of two (D,1) ones: f[:,0]=h@a1, f[:,1]=h@a2.
    f = jnp.dot(h, a12_ref[...], preferred_element_type=jnp.float32)  # (TQ, 2)
    h_ref[...] = h.astype(h_ref.dtype)
    f_ref[...] = f


# ---------------------------------------------------------------------------
# Pass 2: flash-style (online-softmax) masked attention + att @ h, key-tiled.
# ---------------------------------------------------------------------------
def _gat_attention_kernel(
    f1_ref, f2_ref, adj_ref, h_ref, out_ref, m_ref, l_ref, acc_ref,
    *, alpha, concat, block_k, h_resident,
):
    k = pl.program_id(1)

    @pl.when(k == 0)
    def _():
        m_ref[...] = jnp.full_like(m_ref, -jnp.inf)
        l_ref[...] = jnp.zeros_like(l_ref)
        acc_ref[...] = jnp.zeros_like(acc_ref)

    # e[i, j] = LeakyReLU(f1[i] + f2[j]); f1 is (TQ,1), f2 is lane-major (1,TK)
    # -> pure broadcast, no per-tile transpose.  Masking is an additive bias:
    # 0 for edges, -3e4 for non-edges, so exp underflows to exactly 0 for any
    # connected row (same result as PyTorch's -9e15 select) while fully
    # isolated rows fall back to uniform attention, matching PyTorch exactly.
    s = f1_ref[...] + f2_ref[...]                              # (TQ, TK)
    if 0.0 <= alpha <= 1.0:
        s = jnp.maximum(s, alpha * s)                          # LeakyReLU
    else:
        s = jnp.where(s > 0, s, alpha * s)
    s = s + (adj_ref[...].astype(jnp.float32) * 3.0e4 - 3.0e4)

    # Online softmax over the key axis with deferred normalisation.
    m_prev = m_ref[...]
    m_new = jnp.maximum(m_prev, jnp.max(s, axis=1, keepdims=True))
    rescale = jnp.exp(m_prev - m_new)                          # (TQ, 1)
    p = jnp.exp(s - m_new)                                     # unnormalised
    l_ref[...] = rescale * l_ref[...] + jnp.sum(p, axis=1, keepdims=True)

    if h_resident:
        start = pl.multiple_of(k * block_k, block_k)
        h_blk = h_ref[pl.ds(start, block_k), :]                # (TK, D_pad) bf16
    else:
        h_blk = h_ref[...]                                     # streamed key tile
    acc_ref[...] = rescale * acc_ref[...] + jnp.dot(
        p.astype(jnp.bfloat16), h_blk, preferred_element_type=jnp.float32
    )
    m_ref[...] = m_new

    # TODO(synk): F.dropout on the attention matrix is a training-time
    # stochastic op; this kernel implements inference semantics (identity).

    @pl.when(k == pl.num_programs(1) - 1)
    def _():
        # Deferred normalisation: one (TQ, D_pad) scale instead of (TQ, N).
        hp = acc_ref[...] * pl.reciprocal(l_ref[...], approx=True)
        if concat:
            # ELU (alpha=1.0); clamp so the dead branch never sees exp(+large).
            hp = jnp.where(hp > 0, hp, jnp.exp(jnp.minimum(hp, 0.0)) - 1.0)
        out_ref[...] = hp.astype(out_ref.dtype)


def _gat_forward(x_p, adj_p, w_p, a12, *, alpha, concat, out_dtype,
                 block_q, block_k, n_pad, d_pad, buffer_hints):
    f_in = x_p.shape[1]
    grid_q = n_pad // block_q
    grid_k = n_pad // block_k
    vmem_limit = _default_vmem_limit_bytes()

    def hint(n):
        return n if buffer_hints else None

    # ---- pass 1: h (bf16, lane-padded) and fused attention-vector products f.
    h_bf16, f = pl.pallas_call(
        _gat_project_kernel,
        out_shape=(
            jax.ShapeDtypeStruct((n_pad, d_pad), jnp.bfloat16),
            jax.ShapeDtypeStruct((n_pad, 2), jnp.float32),
        ),
        grid=(grid_q,),
        in_specs=[
            _block_spec((block_q, f_in), lambda i: (i, 0)),
            _block_spec((f_in, d_pad), lambda i: (0, 0), buffers=hint(1)),
            _block_spec((d_pad, 2), lambda i: (0, 0), buffers=hint(1)),
        ],
        out_specs=(
            _block_spec((block_q, d_pad), lambda i: (i, 0)),
            _block_spec((block_q, 2), lambda i: (i, 0)),
        ),
        compiler_params=pltpu.CompilerParams(
            dimension_semantics=("parallel",),
            vmem_limit_bytes=vmem_limit,
        ),
    )(x_p, w_p, a12)

    f1 = f[:, 0:1]        # (N_pad, 1)  query-side logits, sublane-major
    f2_row = f[:, 1:2].T  # (1, N_pad)  key-side logits, lane-major (one-time)

    # Keep h resident in VMEM across the key sweep only while it comfortably
    # fits the per-generation budget (v7x: 64 MiB); otherwise stream it per
    # key tile alongside the adjacency.
    h_resident = (n_pad * d_pad * 2) <= vmem_limit // 4
    if h_resident:
        h_spec = _block_spec((n_pad, d_pad), lambda i, k: (0, 0), buffers=hint(1))
    else:
        h_spec = _block_spec((block_k, d_pad), lambda i, k: (k, 0))

    cost = pl.CostEstimate(
        flops=2 * n_pad * n_pad * d_pad + 8 * n_pad * n_pad,
        transcendentals=n_pad * n_pad,
        bytes_accessed=(
            n_pad * n_pad * 1                                   # int8 adj stream
            + (n_pad * d_pad * 2 if h_resident else grid_q * n_pad * d_pad * 2)
            + n_pad * d_pad * jnp.dtype(out_dtype).itemsize
        ),
    )

    # ---- pass 2: flash-style key-tiled masked-softmax attention + att @ h.
    # TODO(synk): on v5e (HBM-bound) bit-pack adj to 1 bit/edge and rebuild the
    # mask in-kernel to cut the dominant N^2 stream a further 8x.
    out_p = pl.pallas_call(
        functools.partial(_gat_attention_kernel, alpha=alpha, concat=concat,
                          block_k=block_k, h_resident=h_resident),
        out_shape=jax.ShapeDtypeStruct((n_pad, d_pad), out_dtype),
        grid=(grid_q, grid_k),
        in_specs=[
            _block_spec((block_q, 1), lambda i, k: (i, 0)),           # f1 tile
            _block_spec((1, block_k), lambda i, k: (0, k)),           # f2 key tile
            _block_spec((block_q, block_k), lambda i, k: (i, k),      # adj tile
                        buffers=(hint(3) if grid_k >= 3 else None)),
            h_spec,                                                   # h
        ],
        out_specs=_block_spec((block_q, d_pad), lambda i, k: (i, 0)),
        scratch_shapes=[
            pltpu.VMEM((block_q, 1), jnp.float32),       # running max  m
            pltpu.VMEM((block_q, 1), jnp.float32),       # running denom l
            pltpu.VMEM((block_q, d_pad), jnp.float32),   # output accumulator
        ],
        compiler_params=pltpu.CompilerParams(
            dimension_semantics=("parallel", "arbitrary"),
            vmem_limit_bytes=vmem_limit,
        ),
        cost_estimate=cost,
    )(f1, f2_row, adj_p, h_bf16)
    return out_p


def graph_attention_layer(x, adj, W, a, *, alpha=0.2, dropout=0.0, concat=True,
                          block_q=None, block_k=None):
    """Pallas GAT forward. x:(N,Fin) adj:(N,N) W:(Fin,D) a:(2D,1) -> (N,D)."""
    del dropout  # TODO(synk): attention dropout is training-only (identity here).
    N, f_in = x.shape
    D = W.shape[1]
    out_dtype = x.dtype

    # Geometry: pad the output feature dim to a lane-dense multiple of 128 so
    # stores are full-lane vst and att@h has a full-width MXU output; tile
    # query rows and key columns so only O(TQ*TK) adjacency + intermediates are
    # resident per grid step.
    d_pad = _round_up(max(D, 128), 128)
    auto_q, auto_k, _ = _choose_tiles(N)
    if block_q is None:
        block_q = auto_q
    if block_k is None:
        block_k = auto_k
    n_pad = _round_up(N, block_q)
    if n_pad % block_k != 0:
        block_k = n_pad  # fall back to a single (full-dim) key tile

    # Zero padding is exact: zero rows of x give zero rows of h, and padded
    # adjacency columns are masked so their exp weight underflows to 0.
    x_p = jnp.zeros((n_pad, f_in), x.dtype).at[:N, :].set(x)
    w_p = jnp.zeros((f_in, d_pad), jnp.bfloat16).at[:, :D].set(W.astype(jnp.bfloat16))
    a12 = jnp.zeros((d_pad, 2), jnp.float32)
    a12 = a12.at[:D, 0].set(a[:D, 0].astype(jnp.float32))
    a12 = a12.at[:D, 1].set(a[D:, 0].astype(jnp.float32))
    # Adjacency travels as int8: the N^2 adj read dominates HBM traffic.
    adj_p = jnp.zeros((n_pad, n_pad), jnp.int8).at[:N, :N].set(
        (adj > 0).astype(jnp.int8))

    kwargs = dict(alpha=alpha, concat=concat, out_dtype=out_dtype,
                  block_q=block_q, block_k=block_k, n_pad=n_pad, d_pad=d_pad)
    try:
        out_p = _gat_forward(x_p, adj_p, w_p, a12, buffer_hints=True, **kwargs)
    except Exception:
        if not _HAS_BUFFERED:
            raise
        # This Pallas/Mosaic version rejects pipeline-depth hints at lowering
        # time; retry with default double-buffering (hints are perf-only).
        out_p = _gat_forward(x_p, adj_p, w_p, a12, buffer_hints=False, **kwargs)

    return out_p[:N, :D]


def _xavier_uniform(key, shape, gain):
    fan_in, fan_out = shape
    limit = gain * jnp.sqrt(6.0 / (fan_in + fan_out))
    return jax.random.uniform(key, shape, jnp.float32, -limit, limit)


def _reference(x, adj, W, a, alpha, concat):
    """Pure-JAX reference mirroring the PyTorch forward (eval mode), using the
    same bf16-operand / f32-accumulation matmul policy as the kernel."""
    h = jnp.dot(x.astype(jnp.bfloat16), W.astype(jnp.bfloat16),
                preferred_element_type=jnp.float32)
    D = W.shape[1]
    e = (h @ a[:D]) + (h @ a[D:]).T
    e = jnp.where(e > 0, e, alpha * e)
    att = jnp.where(adj > 0, e, jnp.full_like(e, -9e15))
    att = jax.nn.softmax(att, axis=1)
    h_b = h.astype(jnp.bfloat16)
    hp = jnp.dot(att.astype(jnp.bfloat16), h_b, preferred_element_type=jnp.float32)
    return jax.nn.elu(hp) if concat else hp


if __name__ == "__main__":
    ALPHA, CONCAT = 0.2, True
    key = jax.random.PRNGKey(0)
    k_small, k_big = jax.random.split(key)

    def make_problem(k, n, f_in, d):
        k_x, k_adj, k_w, k_a = jax.random.split(k, 4)
        x = jax.random.normal(k_x, (n, f_in), jnp.float32)
        adj = (jax.random.uniform(k_adj, (n, n)) > 0.6).astype(jnp.int8)
        adj = jnp.maximum(adj, jnp.eye(n, dtype=jnp.int8))  # self-loops
        W = _xavier_uniform(k_w, (f_in, d), gain=1.414)
        a = _xavier_uniform(k_a, (2 * d, 1), gain=1.414)
        return x, adj, W, a

    # (1) small single-tile problem, (2) a problem large enough to exercise the
    # key-tiled online-softmax path (multiple query and key tiles).
    for (n, f_in, d), k in (((16, 32, 8), k_small), ((600, 64, 8), k_big)):
        x, adj, W, a = make_problem(k, n, f_in, d)
        out = graph_attention_layer(x, adj, W, a, alpha=ALPHA, concat=CONCAT)
        out = jax.block_until_ready(out)
        ref = _reference(x, adj, W, a, ALPHA, CONCAT)
        assert out.shape == (n, d)
        assert jnp.allclose(out, ref, atol=1e-2, rtol=1e-2), f"mismatch at N={n}"

    print("KERNEL_OK")
</pallas_src>

<mosaic_0001>
module attributes {stable_mosaic.version = 11 : i64} {
  func.func @_gat_project_kernel(%arg0: i32, %arg1: memref<32x32xf32, #tpu.memory_space<vmem>>, %arg2: memref<32x128xbf16, #tpu.memory_space<vmem>>, %arg3: memref<128x2xf32, #tpu.memory_space<vmem>>, %arg4: memref<32x128xbf16, #tpu.memory_space<vmem>>, %arg5: memref<32x2xf32, #tpu.memory_space<vmem>>) attributes {dimension_semantics = [#tpu.dimension_semantics<parallel>], iteration_bounds = array<i64: 1>, scalar_prefetch = 0 : i64, scratch_operands = 0 : i64, tpu.core_type = #tpu.core_type<tc>, window_params = [{transform_indices = @transform_0, window_bounds = array<i64: 32, 32>}, {pipeline_mode = #tpu.pipeline_mode<synchronous>, transform_indices = @transform_1, window_bounds = array<i64: 32, 128>}, {pipeline_mode = #tpu.pipeline_mode<synchronous>, transform_indices = @transform_2, window_bounds = array<i64: 128, 2>}, {transform_indices = @transform_3, window_bounds = array<i64: 32, 128>}, {transform_indices = @transform_4, window_bounds = array<i64: 32, 2>}]} {
    %c0 = arith.constant 0 : index
    %c0_0 = arith.constant 0 : index
    %0 = vector.load %arg1[%c0, %c0_0] : memref<32x32xf32, #tpu.memory_space<vmem>>, vector<32x32xf32>
    %1 = arith.truncf %0 : vector<32x32xf32> to vector<32x32xbf16>
    %c0_1 = arith.constant 0 : index
    %c0_2 = arith.constant 0 : index
    %2 = vector.load %arg2[%c0_1, %c0_2] : memref<32x128xbf16, #tpu.memory_space<vmem>>, vector<32x128xbf16>
    %cst = arith.constant dense<0.000000e+00> : vector<32x128xf32>
    %3 = tpu.matmul %1, %2, %cst {dimension_numbers = #tpu.dot_dimension_numbers<[1], [0], [0], [1], [0, 0, 1, 1], [], []>} : vector<32x32xbf16>, vector<32x128xbf16>, vector<32x128xf32> -> vector<32x128xf32>
    %c0_3 = arith.constant 0 : index
    %c0_4 = arith.constant 0 : index
    %4 = vector.load %arg3[%c0_3, %c0_4] : memref<128x2xf32, #tpu.memory_space<vmem>>, vector<128x2xf32>
    %cst_5 = arith.constant dense<0.000000e+00> : vector<32x2xf32>
    %5 = tpu.matmul %3, %4, %cst_5 {dimension_numbers = #tpu.dot_dimension_numbers<[1], [0], [0], [1], [0, 0, 1, 1], [], []>} : vector<32x128xf32>, vector<128x2xf32>, vector<32x2xf32> -> vector<32x2xf32>
    %6 = arith.truncf %3 : vector<32x128xf32> to vector<32x128xbf16>
    %c0_6 = arith.constant 0 : index
    %c0_7 = arith.constant 0 : index
    %7 = vector.load %arg4[%c0_6, %c0_7] : memref<32x128xbf16, #tpu.memory_space<vmem>>, vector<32x128xbf16>
    tpu.vector_store %arg4[%c0_6, %c0_7], %6 {strides = array<i32>} : memref<32x128xbf16, #tpu.memory_space<vmem>>, vector<32x128xbf16>,
    %c0_8 = arith.constant 0 : index
    %c0_9 = arith.constant 0 : index
    %8 = vector.load %arg5[%c0_8, %c0_9] : memref<32x2xf32, #tpu.memory_space<vmem>>, vector<32x2xf32>
    tpu.vector_store %arg5[%c0_8, %c0_9], %5 {strides = array<i32>} : memref<32x2xf32, #tpu.memory_space<vmem>>, vector<32x2xf32>,
    return
  }
  func.func @transform_0(%arg0: i32) -> (i32, i32) {
    %c0_i32 = arith.constant 0 : i32
    %c0_i32_0 = arith.constant 0 : i32
    return %arg0, %c0_i32 : i32, i32
  }
  func.func @transform_1(%arg0: i32) -> (i32, i32) {
    %c0_i32 = arith.constant 0 : i32
    %c0_i32_0 = arith.constant 0 : i32
    %c0_i32_1 = arith.constant 0 : i32
    return %c0_i32, %c0_i32_0 : i32, i32
  }
  func.func @transform_2(%arg0: i32) -> (i32, i32) {
    %c0_i32 = arith.constant 0 : i32
    %c0_i32_0 = arith.constant 0 : i32
    %c0_i32_1 = arith.constant 0 : i32
    return %c0_i32, %c0_i32_0 : i32, i32
  }
  func.func @transform_3(%arg0: i32) -> (i32, i32) {
    %c0_i32 = arith.constant 0 : i32
    %c0_i32_0 = arith.constant 0 : i32
    return %arg0, %c0_i32 : i32, i32
  }
  func.func @transform_4(%arg0: i32) -> (i32, i32) {
    %c0_i32 = arith.constant 0 : i32
    %c0_i32_0 = arith.constant 0 : i32
    return %arg0, %c0_i32 : i32, i32
  }
}

module attributes {stable_mosaic.version = 11 : i64} {
  func.func @_gat_project_kernel(%arg0: i32, %arg1: memref<32x32xf32, #tpu.memory_space<vmem>>, %arg2: memref<32x128xbf16, #tpu.memory_space<vmem>>, %arg3: memref<128x2xf32, #tpu.memory_space<vmem>>, %arg4: memref<32x128xbf16, #tpu.memory_space<vmem>>, %arg5: memref<32x2xf32, #tpu.memory_space<vmem>>) attributes {dimension_semantics = [#tpu.dimension_semantics<parallel>], iteration_bounds = array<i64: 1>, scalar_prefetch = 0 : i64, scratch_operands = 0 : i64, tpu.core_type = #tpu.core_type<tc>, window_params = [{transform_indices = @transform_0, window_bounds = array<i64: 32, 32>}, {pipeline_mode = #tpu.pipeline_mode<synchronous>, transform_indices = @transform_1, window_bounds = array<i64: 32, 128>}, {pipeline_mode = #tpu.pipeline_mode<synchronous>, transform_indices = @transform_2, window_bounds = array<i64: 128, 2>}, {transform_indices = @transform_3, window_bounds = array<i64: 32, 128>}, {transform_indices = @transform_4, window_bounds = array<i64: 32, 2>}]} {
    %c0 = arith.constant 0 : index
    %c0_0 = arith.constant 0 : index
    %0 = vector.load %arg1[%c0, %c0_0] : memref<32x32xf32, #tpu.memory_space<vmem>>, vector<32x32xf32>
    %1 = arith.truncf %0 : vector<32x32xf32> to vector<32x32xbf16>
    %c0_1 = arith.constant 0 : index
    %c0_2 = arith.constant 0 : index
    %2 = vector.load %arg2[%c0_1, %c0_2] : memref<32x128xbf16, #tpu.memory_space<vmem>>, vector<32x128xbf16>
    %cst = arith.constant dense<0.000000e+00> : vector<32x128xf32>
    %3 = tpu.matmul %1, %2, %cst {dimension_numbers = #tpu.dot_dimension_numbers<[1], [0], [0], [1], [0, 0, 1, 1], [], []>} : vector<32x32xbf16>, vector<32x128xbf16>, vector<32x128xf32> -> vector<32x128xf32>
    %c0_3 = arith.constant 0 : index
    %c0_4 = arith.constant 0 : index
    %4 = vector.load %arg3[%c0_3, %c0_4] : memref<128x2xf32, #tpu.memory_space<vmem>>, vector<128x2xf32>
    %cst_5 = arith.constant dense<0.000000e+00> : vector<32x2xf32>
    %5 = tpu.matmul %3, %4, %cst_5 {dimension_numbers = #tpu.dot_dimension_numbers<[1], [0], [0], [1], [0, 0, 1, 1], [], []>} : vector<32x128xf32>, vector<128x2xf32>, vector<32x2xf32> -> vector<32x2xf32>
    %6 = arith.truncf %3 : vector<32x128xf32> to vector<32x128xbf16>
    %c0_6 = arith.constant 0 : index
    %c0_7 = arith.constant 0 : index
    %7 = vector.load %arg4[%c0_6, %c0_7] : memref<32x128xbf16, #tpu.memory_space<vmem>>, vector<32x128xbf16>
    tpu.vector_store %arg4[%c0_6, %c0_7], %6 {strides = array<i32>} : memref<32x128xbf16, #tpu.memory_space<vmem>>, vector<32x128xbf16>,
    %c0_8 = arith.constant 0 : index
    %c0_9 = arith.constant 0 : index
    %8 = vector.load %arg5[%c0_8, %c0_9] : memref<32x2xf32, #tpu.memory_space<vmem>>, vector<32x2xf32>
    tpu.vector_store %arg5[%c0_8, %c0_9], %5 {strides = array<i32>} : memref<32x2xf32, #tpu.memory_space<vmem>>, vector<32x2xf32>,
    return
  }
  func.func @transform_0(%arg0: i32) -> (i32, i32) {
    %c0_i32 = arith.constant 0 : i32
    %c0_i32_0 = arith.constant 0 : i32
    return %arg0, %c0_i32 : i32, i32
  }
  func.func @transform_1(%arg0: i32) -> (i32, i32) {
    %c0_i32 = arith.constant 0 : i32
    %c0_i32_0 = arith.constant 0 : i32
    %c0_i32_1 = arith.constant 0 : i32
    return %c0_i32, %c0_i32_0 : i32, i32
  }
  func.func @transform_2(%arg0: i32) -> (i32, i32) {
    %c0_i32 = arith.constant 0 : i32
    %c0_i32_0 = arith.constant 0 : i32
    %c0_i32_1 = arith.constant 0 : i32
    return %c0_i32, %c0_i32_0 : i32, i32
  }
  func.func @transform_3(%arg0: i32) -> (i32, i32) {
    %c0_i32 = arith.constant 0 : i32
    %c0_i32_0 = arith.constant 0 : i32
    return %arg0, %c0_i32 : i32, i32
  }
  func.func @transform_4(%arg0: i32) -> (i32, i32) {
    %c0_i32 = arith.constant 0 : i32
    %c0_i32_0 = arith.constant 0 : i32
    return %arg0, %c0_i32 : i32, i32
  }
}

</mosaic_0001>

<llo_original>
// kernel: tpu_custom_call.1
$region0: #{tpu_custom_call.1}
  #allocation0 [shape = 'u32[]', space=smem, size = 0x4, offset = 0x4, fixed_abs, tag = 'smem constant byte address 0x4 - core index']
  #allocation1 [shape = 'u32[144,128]{1,0:T(1,128)}', space=vmem, size = 0x12000, scoped, tag = 'internal scratch']
  %s0 = inlined_call_operand.hbm [shape: f32[32,32], index: 0, kind: input, shape index: {}]
  %s1 = inlined_call_operand.hbm [shape: bf16[32,128], index: 1, kind: input, shape index: {}]
  %s2 = inlined_call_operand.hbm [shape: f32[128,2], index: 2, kind: input, shape index: {}]
  %s3 = inlined_call_operand.hbm [shape: bf16[32,128], index: 3, kind: output, shape index: {0}]
  %s4 = inlined_call_operand.hbm [shape: f32[32,2], index: 4, kind: output, shape index: {1}]
  %5 = xla_tuple %s3, %s4
  %s6 = sld [smem:[#allocation0]]
  $region42: #{tpu_custom_call.1} parent=0
    _
  %s8 = ssub.s32 1, %s6
  %s9 = scalar_select 0, %s8, %s6
  $region1: #{tpu_custom_call.1} parent=0
    #allocation2 [shape = 'u8[16384]{0}', space=vmem, size = 0x4000, scoped, tag = 'input window, operand 0, single buffered']
    #allocation3 [shape = 's32[1]{0}', space=sflag, size = 0x4, scoped, tag = 'scoped memory for tpu_custom_call.1']
    #allocation4 [shape = 's32[1]{0}', space=sflag, size = 0x4, scoped, tag = 'scoped memory for tpu_custom_call.1']
    #allocation5 [shape = 'u8[8192]{0}', space=vmem, size = 0x2000, scoped, tag = 'input window, operand 1, single buffered']
    #allocation6 [shape = 's32[1]{0}', space=sflag, size = 0x4, scoped, tag = 'scoped memory for tpu_custom_call.1']
    #allocation7 [shape = 'u8[65536]{0}', space=vmem, size = 0x10000, scoped, tag = 'input window, operand 2, single buffered']
    #allocation8 [shape = 'u8[8192]{0}', space=vmem, size = 0x2000, scoped, tag = 'output window, operand 0, single buffered']
    #allocation9 [shape = 'u8[16384]{0}', space=vmem, size = 0x4000, scoped, tag = 'output window, operand 1, single buffered']
    #allocation10 [shape = 's32[1]{0}', space=sflag, size = 0x4, scoped, tag = 'scoped memory for tpu_custom_call.1']
    %10 = vsyncpa [#allocation3], 0
    %11 = vsyncpa [#allocation6], 0
    %12 = vsyncpa [#allocation4], 0
    %13 = vsyncpa [#allocation10], 0
    // Predicated region
    $region2: #{tpu_custom_call.1} parent=1 // pred_check
      _
    $region3: #{tpu_custom_call.1} parent=1 // pred_check_branch
      %15 = sbr.rel (0) target = $region5
    $region4: #{tpu_custom_call.1} parent=1 // pred_region
      %s17 = ssub.s32 512, 512
      %18 = vsyncadd [#allocation3], %s17
      %s19 = sshll.u32 [#allocation2], 4
      %s20 = int_to_ptr.vmem [resolvable:$true] %s19
      %25 = dma.hbm_to_vmem [thread:$0]  %s0, 512, %s20, [#allocation3], 128, 128, 8
    $region5: #{tpu_custom_call.1} parent=1 // pred_fallthru
      _
    // Predicated region
    $region6: #{tpu_custom_call.1} parent=1 // pred_check
      _
    $region7: #{tpu_custom_call.1} parent=1 // pred_check_branch
      %27 = sbr.rel (0) target = $region9
    $region8: #{tpu_custom_call.1} parent=1 // pred_region
      %s29 = ssub.s32 256, 256
      %30 = vsyncadd [#allocation6], %s29
      %s31 = sshll.u32 [#allocation5], 4
      %s32 = int_to_ptr.vmem [resolvable:$true] %s31
      %37 = dma.hbm_to_vmem [thread:$0]  %s1, 256, %s32, [#allocation6], 64, 64, 4
    $region9: #{tpu_custom_call.1} parent=1 // pred_fallthru
      _
    // Predicated region
    $region10: #{tpu_custom_call.1} parent=1 // pred_check
      _
    $region11: #{tpu_custom_call.1} parent=1 // pred_check_branch
      %39 = sbr.rel (0) target = $region13
    $region12: #{tpu_custom_call.1} parent=1 // pred_region
      %s41 = ssub.s32 2048, 2048
      %42 = vsyncadd [#allocation6], %s41
      %s43 = sshll.u32 [#allocation7], 4
      %s44 = int_to_ptr.vmem [resolvable:$true] %s43
      %49 = dma.hbm_to_vmem [thread:$0]  %s2, 2048, %s44, [#allocation6], 128, 128, 8
    $region13: #{tpu_custom_call.1} parent=1 // pred_fallthru
      _
    // Predicated region
    $region14: #{tpu_custom_call.1} parent=1 // pred_check
      _
    $region15: #{tpu_custom_call.1} parent=1 // pred_check_branch
      %51 = sbr.rel (0) target = $region17
    $region16: #{tpu_custom_call.1} parent=1 // pred_region
      %52 = dma.done [#allocation3], 512
    $region17: #{tpu_custom_call.1} parent=1 // pred_fallthru
      _
    // Predicated region
    $region18: #{tpu_custom_call.1} parent=1 // pred_check
      _
    $region19: #{tpu_custom_call.1} parent=1 // pred_check_branch
      %54 = sbr.rel (0) target = $region21
    $region20: #{tpu_custom_call.1} parent=1 // pred_region
      %55 = dma.done [#allocation6], 256
    $region21: #{tpu_custom_call.1} parent=1 // pred_fallthru
      _
    // Predicated region
    $region22: #{tpu_custom_call.1} parent=1 // pred_check
      _
    $region23: #{tpu_custom_call.1} parent=1 // pred_check_branch
      %57 = sbr.rel (0) target = $region25
    $region24: #{tpu_custom_call.1} parent=1 // pred_region
      %58 = dma.done [#allocation6], 2048
    $region25: #{tpu_custom_call.1} parent=1 // pred_fallthru
      _
    %v60 = vld [vmem:[#allocation2] sm:$0xff]
    %v61 = vld [vmem:[#allocation2 + $0x8] sm:$0xff]
    %v62 = vld [vmem:[#allocation2 + $0x10] sm:$0xff]
    %v63 = vld [vmem:[#allocation2 + $0x18] sm:$0xff]
    %v64 = vpack.c.bf16 %v61, %v60
    %v65 = vpack.c.bf16 %v63, %v62
    %v66 = vld [vmem:[#allocation5] sm:$0xf]
    %v67 = vld [vmem:[#allocation5 + $0x4] sm:$0xf]
    %v68 = vld [vmem:[#allocation5 + $0x8] sm:$0xf]
    %v69 = vld [vmem:[#allocation5 + $0xc] sm:$0xf]
    %v74 = vunpack.c.l.b16 %v66
    %v75 = vunpack.c.l.b16 %v67
    %v76 = vunpack.c.l.b16 %v68
    %v77 = vunpack.c.l.b16 %v69
    %v78 = vpack.c.b16 %v75, %v74
    %v79 = vpack.c.b16 %v77, %v76
    %vm82 = vcmask 261120
    %v84 = vsel %vm82, %v64, 0
    %v87 = vsel %vm82, %v65, 0
    %89 = vmatprep.subr.bf16.mxu0 0
    %90 = vmatpush1.bf16.msra.mxu0 %v78
    %91 = vmatprep.subr.bf16.mxu0 0
    %92 = vmatpush1.bf16.msra.mxu0 %v79
    %93 = vmatprep.subr.bf16.mxu0 0
    %94 = vmatpush1.bf16.msra.mxu0 0
    %95 = vmatprep.subr.bf16.mxu0 0
    %96 = vmatpush1.bf16.msra.mxu0 0
    %97 = vmatprep.subr.bf16.mxu0 0
    %98 = vmatpush1.bf16.msra.mxu0 0
    %99 = vmatprep.subr.bf16.mxu0 0
    %100 = vmatpush1.bf16.msra.mxu0 0
    %101 = vmatprep.subr.bf16.mxu0 0
    %102 = vmatpush1.bf16.msra.mxu0 0
    %103 = vmatprep.subr.bf16.mxu0 0
    %104 = vmatpush1.bf16.msra.mxu0 0
    %105 = vmatprep.subr.bf16.mxu0 0
    %106 = vmatpush1.bf16.msra.mxu0 0
    %107 = vmatprep.subr.bf16.mxu0 0
    %108 = vmatpush1.bf16.msra.mxu0 0
    %109 = vmatprep.subr.bf16.mxu0 0
    %110 = vmatpush1.bf16.msra.mxu0 0
    %111 = vmatprep.subr.bf16.mxu0 0
    %112 = vmatpush1.bf16.msra.mxu0 0
    %113 = vmatprep.subr.bf16.mxu0 0
    %114 = vmatpush1.bf16.msra.mxu0 0
    %115 = vmatprep.subr.bf16.mxu0 0
    %116 = vmatpush1.bf16.msra.mxu0 0
    %117 = vmatprep.subr.bf16.mxu0 0
    %118 = vmatpush1.bf16.msra.mxu0 0
    %119 = vmatprep.subr.bf16.mxu0 0
    %120 = vmatpush1.bf16.msra.mxu0 0
    %121 = vmatprep.mubr.bf16.mxu0 0
    %122 = vmatmul.mubr.bf16.gmra.mrb[0].mxu0 %v84
    %v123 = vpop.f32.mrb[0].mxu0
    %v124 = vadd.f32 0.0, %v123
    %v125 = vpop.f32.mrb[0].mxu0
    %v126 = vpop.f32.mrb[0].mxu0
    %v127 = vadd.f32 0.0, %v126
    %v128 = vpop.f32.mrb[0].mxu0
    %129 = vmatprep.mubr.bf16.mxu0 0
    %130 = vmatmul.mubr.bf16.gmra.mrb[0].mxu0 %v87
    %v131 = vpop.f32.mrb[0].mxu0
    %v132 = vadd.f32 0.0, %v131
    %v133 = vpop.f32.mrb[0].mxu0
    %v134 = vpop.f32.mrb[0].mxu0
    %v135 = vadd.f32 0.0, %v134
    %v136 = vpop.f32.mrb[0].mxu0
    %137 = vdwg.mxu0
    %v138 = vld [vmem:[#allocation7] sm:$0xff]
    %v139 = vld [vmem:[#allocation7 + $0x8] sm:$0xff]
    %v140 = vld [vmem:[#allocation7 + $0x10] sm:$0xff]
    %v141 = vld [vmem:[#allocation7 + $0x18] sm:$0xff]
    %v142 = vld [vmem:[#allocation7 + $0x20] sm:$0xff]
    %v143 = vld [vmem:[#allocation7 + $0x28] sm:$0xff]
    %v144 = vld [vmem:[#allocation7 + $0x30] sm:$0xff]
    %v145 = vld [vmem:[#allocation7 + $0x38] sm:$0xff]
    %v146 = vld [vmem:[#allocation7 + $0x40] sm:$0xff]
    %v147 = vld [vmem:[#allocation7 + $0x48] sm:$0xff]
    %v148 = vld [vmem:[#allocation7 + $0x50] sm:$0xff]
    %v149 = vld [vmem:[#allocation7 + $0x58] sm:$0xff]
    %v150 = vld [vmem:[#allocation7 + $0x60] sm:$0xff]
    %v151 = vld [vmem:[#allocation7 + $0x68] sm:$0xff]
    %v152 = vld [vmem:[#allocation7 + $0x70] sm:$0xff]
    %v153 = vld [vmem:[#allocation7 + $0x78] sm:$0xff]
    %154 = vmatprep.subr.mxu0 0.0
    %155 = vmatpush1.msra.mxu0 %v138
    %156 = vmatprep.subr.mxu0 0.0
    %157 = vmatpush1.msra.mxu0 %v139
    %158 = vmatprep.subr.mxu0 0.0
    %159 = vmatpush1.msra.mxu0 %v140
    %160 = vmatprep.subr.mxu0 0.0
    %161 = vmatpush1.msra.mxu0 %v141
    %162 = vmatprep.subr.mxu0 0.0
    %163 = vmatpush1.msra.mxu0 %v142
    %164 = vmatprep.subr.mxu0 0.0
    %165 = vmatpush1.msra.mxu0 %v143
    %166 = vmatprep.subr.mxu0 0.0
    %167 = vmatpush1.msra.mxu0 %v144
    %168 = vmatprep.subr.mxu0 0.0
    %169 = vmatpush1.msra.mxu0 %v145
    %170 = vmatprep.subr.mxu0 0.0
    %171 = vmatpush1.msra.mxu0 %v146
    %172 = vmatprep.subr.mxu0 0.0
    %173 = vmatpush1.msra.mxu0 %v147
    %174 = vmatprep.subr.mxu0 0.0
    %175 = vmatpush1.msra.mxu0 %v148
    %176 = vmatprep.subr.mxu0 0.0
    %177 = vmatpush1.msra.mxu0 %v149
    %178 = vmatprep.subr.mxu0 0.0
    %179 = vmatpush1.msra.mxu0 %v150
    %180 = vmatprep.subr.mxu0 0.0
    %181 = vmatpush1.msra.mxu0 %v151
    %182 = vmatprep.subr.mxu0 0.0
    %183 = vmatpush1.msra.mxu0 %v152
    %184 = vmatprep.subr.mxu0 0.0
    %185 = vmatpush1.msra.mxu0 %v153
    %186 = vmatprep.subr.mxu0 0.0
    %187 = vmatpush1.msra.mxu0 0.0
    %188 = vmatprep.subr.mxu0 0.0
    %189 = vmatpush1.msra.mxu0 0.0
    %190 = vmatprep.subr.mxu0 0.0
    %191 = vmatpush1.msra.mxu0 0.0
    %192 = vmatprep.subr.mxu0 0.0
    %193 = vmatpush1.msra.mxu0 0.0
    %194 = vmatprep.subr.mxu0 0.0
    %195 = vmatpush1.msra.mxu0 0.0
    %196 = vmatprep.subr.mxu0 0.0
    %197 = vmatpush1.msra.mxu0 0.0
    %198 = vmatprep.subr.mxu0 0.0
    %199 = vmatpush1.msra.mxu0 0.0
    %200 = vmatprep.subr.mxu0 0.0
    %201 = vmatpush1.msra.mxu0 0.0
    %202 = vmatprep.subr.mxu0 0.0
    %203 = vmatpush1.msra.mxu0 0.0
    %204 = vmatprep.subr.mxu0 0.0
    %205 = vmatpush1.msra.mxu0 0.0
    %206 = vmatprep.subr.mxu0 0.0
    %207 = vmatpush1.msra.mxu0 0.0
    %208 = vmatprep.subr.mxu0 0.0
    %209 = vmatpush1.msra.mxu0 0.0
    %210 = vmatprep.subr.mxu0 0.0
    %211 = vmatpush1.msra.mxu0 0.0
    %212 = vmatprep.subr.mxu0 0.0
    %213 = vmatpush1.msra.mxu0 0.0
    %214 = vmatprep.subr.mxu0 0.0
    %215 = vmatpush1.msra.mxu0 0.0
    %216 = vmatprep.subr.mxu0 0.0
    %217 = vmatpush1.msra.mxu0 0.0
    %218 = vmatprep.mubr.f32.mxu0 0.0
    %219 = vmatmul.mubr.f32.gmra.mrb[0].mxu0 %v124
    %v220 = vpop.f32.mrb[0].mxu0
    %v221 = vadd.f32 0.0, %v220
    %v222 = vpop.f32.mrb[0].mxu0
    %223 = vmatprep.mubr.f32.mxu0 0.0
    %224 = vmatmul.mubr.f32.gmra.mrb[0].mxu0 %v127
    %v225 = vpop.f32.mrb[0].mxu0
    %v226 = vadd.f32 0.0, %v225
    %v227 = vpop.f32.mrb[0].mxu0
    %228 = vmatprep.mubr.f32.mxu0 0.0
    %229 = vmatmul.mubr.f32.gmra.mrb[0].mxu0 %v132
    %v230 = vpop.f32.mrb[0].mxu0
    %v231 = vadd.f32 0.0, %v230
    %v232 = vpop.f32.mrb[0].mxu0
    %233 = vmatprep.mubr.f32.mxu0 0.0
    %234 = vmatmul.mubr.f32.gmra.mrb[0].mxu0 %v135
    %v235 = vpop.f32.mrb[0].mxu0
    %v236 = vadd.f32 0.0, %v235
    %v237 = vpop.f32.mrb[0].mxu0
    %238 = vdwg.mxu0
    %v239 = vpack.c.bf16 %v127, %v124
    %v240 = vpack.c.bf16 %v135, %v132
    %v243 = vunpack.c.l.b16 %v239
    %v244 = vunpack.c.h.b16 %v239
    %v245 = vunpack.c.l.b16 %v240
    %v246 = vunpack.c.h.b16 %v240
    %v247 = vpack.c.b16 %v243, %v243
    %v248 = vpack.c.b16 %v244, %v244
    %v249 = vpack.c.b16 %v245, %v245
    %v250 = vpack.c.b16 %v246, %v246
    %255 = vst [vmem:[#allocation8] sm:$0xf] %v247
    %256 = vst [vmem:[#allocation8 + $0x4] sm:$0xf] %v248
    %257 = vst [vmem:[#allocation8 + $0x8] sm:$0xf] %v249
    %258 = vst [vmem:[#allocation8 + $0xc] sm:$0xf] %v250
    %vm259 = vcmask 15360
    %260 = vst.msk [vmem:[#allocation9] sm:$0xff] %vm259, %v221
    %261 = vst.msk [vmem:[#allocation9 + $0x8] sm:$0xff] %vm259, %v226
    %262 = vst.msk [vmem:[#allocation9 + $0x10] sm:$0xff] %vm259, %v231
    %263 = vst.msk [vmem:[#allocation9 + $0x18] sm:$0xff] %vm259, %v236
    // Predicated region
    $region26: #{tpu_custom_call.1} parent=1 // pred_check
      _
    $region27: #{tpu_custom_call.1} parent=1 // pred_check_branch
      %265 = sbr.rel (0) target = $region29
    $region28: #{tpu_custom_call.1} parent=1 // pred_region
      %s267 = ssub.s32 256, 256
      %268 = vsyncadd [#allocation4], %s267
      %s269 = sshll.u32 [#allocation8], 4
      %s270 = int_to_ptr.vmem [resolvable:$true] %s269
      %275 = dma.vmem_to_hbm [thread:$0]  %s270, 256, %s3, [#allocation4], 64, 64, 4
    $region29: #{tpu_custom_call.1} parent=1 // pred_fallthru
      _
    // Predicated region
    $region30: #{tpu_custom_call.1} parent=1 // pred_check
      _
    $region31: #{tpu_custom_call.1} parent=1 // pred_check_branch
      %277 = sbr.rel (0) target = $region33
    $region32: #{tpu_custom_call.1} parent=1 // pred_region
      %s279 = ssub.s32 512, 512
      %280 = vsyncadd [#allocation10], %s279
      %s281 = sshll.u32 [#allocation9], 4
      %s282 = int_to_ptr.vmem [resolvable:$true] %s281
      %287 = dma.vmem_to_hbm [thread:$0]  %s282, 512, %s4, [#allocation10], 128, 128, 8
    $region33: #{tpu_custom_call.1} parent=1 // pred_fallthru
      _
    // Predicated region
    $region34: #{tpu_custom_call.1} parent=1 // pred_check
      _
    $region35: #{tpu_custom_call.1} parent=1 // pred_check_branch
      %289 = sbr.rel (0) target = $region37
    $region36: #{tpu_custom_call.1} parent=1 // pred_region
      %290 = dma.done [#allocation4], 256
    $region37: #{tpu_custom_call.1} parent=1 // pred_fallthru
      _
    // Predicated region
    $region38: #{tpu_custom_call.1} parent=1 // pred_check
      _
    $region39: #{tpu_custom_call.1} parent=1 // pred_check_branch
      %292 = sbr.rel (0) target = $region41
    $region40: #{tpu_custom_call.1} parent=1 // pred_region
      %293 = dma.done [#allocation10], 512
    $region41: #{tpu_custom_call.1} parent=1 // pred_fallthru
      _
    %294 = vsyncpa [#allocation3], 1
    %295 = vsyncpa [#allocation6], 1
    %296 = vsyncpa [#allocation4], 1
    %297 = vsyncpa [#allocation10], 1

// kernel: tpu_custom_call.1
$region0: #{tpu_custom_call.1}
  #allocation0 [shape = 'u32[]', space=smem, size = 0x4, offset = 0x4, fixed_abs, tag = 'smem constant byte address 0x4 - core index']
  #allocation1 [shape = 'u32[144,128]{1,0:T(1,128)}', space=vmem, size = 0x12000, scoped, tag = 'internal scratch']
  %s0 = inlined_call_operand.hbm [shape: f32[32,32], index: 0, kind: input, shape index: {}]
  %s1 = inlined_call_operand.hbm [shape: bf16[32,128], index: 1, kind: input, shape index: {}]
  %s2 = inlined_call_operand.hbm [shape: f32[128,2], index: 2, kind: input, shape index: {}]
  %s3 = inlined_call_operand.hbm [shape: bf16[32,128], index: 3, kind: output, shape index: {0}]
  %s4 = inlined_call_operand.hbm [shape: f32[32,2], index: 4, kind: output, shape index: {1}]
  %5 = xla_tuple %s3, %s4
  %s6 = sld [smem:[#allocation0]]
  $region42: #{tpu_custom_call.1} parent=0
    _
  %s8 = ssub.s32 1, %s6
  %s9 = scalar_select 0, %s8, %s6
  $region1: #{tpu_custom_call.1} parent=0
    #allocation2 [shape = 'u8[16384]{0}', space=vmem, size = 0x4000, scoped, tag = 'input window, operand 0, single buffered']
    #allocation3 [shape = 's32[1]{0}', space=sflag, size = 0x4, scoped, tag = 'scoped memory for tpu_custom_call.1']
    #allocation4 [shape = 's32[1]{0}', space=sflag, size = 0x4, scoped, tag = 'scoped memory for tpu_custom_call.1']
    #allocation5 [shape = 'u8[8192]{0}', space=vmem, size = 0x2000, scoped, tag = 'input window, operand 1, single buffered']
    #allocation6 [shape = 's32[1]{0}', space=sflag, size = 0x4, scoped, tag = 'scoped memory for tpu_custom_call.1']
    #allocation7 [shape = 'u8[65536]{0}', space=vmem, size = 0x10000, scoped, tag = 'input window, operand 2, single buffered']
    #allocation8 [shape = 'u8[8192]{0}', space=vmem, size = 0x2000, scoped, tag = 'output window, operand 0, single buffered']
    #allocation9 [shape = 'u8[16384]{0}', space=vmem, size = 0x4000, scoped, tag = 'output window, operand 1, single buffered']
    #allocation10 [shape = 's32[1]{0}', space=sflag, size = 0x4, scoped, tag = 'scoped memory for tpu_custom_call.1']
    %10 = vsyncpa [#allocation3], 0
    %11 = vsyncpa [#allocation6], 0
    %12 = vsyncpa [#allocation4], 0
    %13 = vsyncpa [#allocation10], 0
    // Predicated region
    $region2: #{tpu_custom_call.1} parent=1 // pred_check
      _
    $region3: #{tpu_custom_call.1} parent=1 // pred_check_branch
      %15 = sbr.rel (0) target = $region5
    $region4: #{tpu_custom_call.1} parent=1 // pred_region
      %s17 = ssub.s32 512, 512
      %18 = vsyncadd [#allocation3], %s17
      %s19 = sshll.u32 [#allocation2], 4
      %s20 = int_to_ptr.vmem [resolvable:$true] %s19
      %25 = dma.hbm_to_vmem [thread:$0]  %s0, 512, %s20, [#allocation3], 128, 128, 8
    $region5: #{tpu_custom_call.1} parent=1 // pred_fallthru
      _
    // Predicated region
    $region6: #{tpu_custom_call.1} parent=1 // pred_check
      _
    $region7: #{tpu_custom_call.1} parent=1 // pred_check_branch
      %27 = sbr.rel (0) target = $region9
    $region8: #{tpu_custom_call.1} parent=1 // pred_region
      %s29 = ssub.s32 256, 256
      %30 = vsyncadd [#allocation6], %s29
      %s31 = sshll.u32 [#allocation5], 4
      %s32 = int_to_ptr.vmem [resolvable:$true] %s31
      %37 = dma.hbm_to_vmem [thread:$0]  %s1, 256, %s32, [#allocation6], 64, 64, 4
    $region9: #{tpu_custom_call.1} parent=1 // pred_fallthru
      _
    // Predicated region
    $region10: #{tpu_custom_call.1} parent=1 // pred_check
      _
    $region11: #{tpu_custom_call.1} parent=1 // pred_check_branch
      %39 = sbr.rel (0) target = $region13
    $region12: #{tpu_custom_call.1} parent=1 // pred_region
      %s41 = ssub.s32 2048, 2048
      %42 = vsyncadd [#allocation6], %s41
      %s43 = sshll.u32 [#allocation7], 4
      %s44 = int_to_ptr.vmem [resolvable:$true] %s43
      %49 = dma.hbm_to_vmem [thread:$0]  %s2, 2048, %s44, [#allocation6], 128, 128, 8
    $region13: #{tpu_custom_call.1} parent=1 // pred_fallthru
      _
    // Predicated region
    $region14: #{tpu_custom_call.1} parent=1 // pred_check
      _
    $region15: #{tpu_custom_call.1} parent=1 // pred_check_branch
      %51 = sbr.rel (0) target = $region17
    $region16: #{tpu_custom_call.1} parent=1 // pred_region
      %52 = dma.done [#allocation3], 512
    $region17: #{tpu_custom_call.1} parent=1 // pred_fallthru
      _
    // Predicated region
    $region18: #{tpu_custom_call.1} parent=1 // pred_check
      _
    $region19: #{tpu_custom_call.1} parent=1 // pred_check_branch
      %54 = sbr.rel (0) target = $region21
    $region20: #{tpu_custom_call.1} parent=1 // pred_region
      %55 = dma.done [#allocation6], 256
    $region21: #{tpu_custom_call.1} parent=1 // pred_fallthru
      _
    // Predicated region
    $region22: #{tpu_custom_call.1} parent=1 // pred_check
      _
    $region23: #{tpu_custom_call.1} parent=1 // pred_check_branch
      %57 = sbr.rel (0) target = $region25
    $region24: #{tpu_custom_call.1} parent=1 // pred_region
      %58 = dma.done [#allocation6], 2048
    $region25: #{tpu_custom_call.1} parent=1 // pred_fallthru
      _
    %v60 = vld [vmem:[#allocation2] sm:$0xff]
    %v61 = vld [vmem:[#allocation2 + $0x8] sm:$0xff]
    %v62 = vld [vmem:[#allocation2 + $0x10] sm:$0xff]
    %v63 = vld [vmem:[#allocation2 + $0x18] sm:$0xff]
    %v64 = vpack.c.bf16 %v61, %v60
    %v65 = vpack.c.bf16 %v63, %v62
    %v66 = vld [vmem:[#allocation5] sm:$0xf]
    %v67 = vld [vmem:[#allocation5 + $0x4] sm:$0xf]
    %v68 = vld [vmem:[#allocation5 + $0x8] sm:$0xf]
    %v69 = vld [vmem:[#allocation5 + $0xc] sm:$0xf]
    %v74 = vunpack.c.l.b16 %v66
    %v75 = vunpack.c.l.b16 %v67
    %v76 = vunpack.c.l.b16 %v68
    %v77 = vunpack.c.l.b16 %v69
    %v78 = vpack.c.b16 %v75, %v74
    %v79 = vpack.c.b16 %v77, %v76
    %vm82 = vcmask 261120
    %v84 = vsel %vm82, %v64, 0
    %v87 = vsel %vm82, %v65, 0
    %89 = vmatprep.subr.bf16.mxu0 0
    %90 = vmatpush1.bf16.msra.mxu0 %v78
    %91 = vmatprep.subr.bf16.mxu0 0
    %92 = vmatpush1.bf16.msra.mxu0 %v79
    %93 = vmatprep.subr.bf16.mxu0 0
    %94 = vmatpush1.bf16.msra.mxu0 0
    %95 = vmatprep.subr.bf16.mxu0 0
    %96 = vmatpush1.bf16.msra.mxu0 0
    %97 = vmatprep.subr.bf16.mxu0 0
    %98 = vmatpush1.bf16.msra.mxu0 0
    %99 = vmatprep.subr.bf16.mxu0 0
    %100 = vmatpush1.bf16.msra.mxu0 0
    %101 = vmatprep.subr.bf16.mxu0 0
    %102 = vmatpush1.bf16.msra.mxu0 0
    %103 = vmatprep.subr.bf16.mxu0 0
    %104 = vmatpush1.bf16.msra.mxu0 0
    %105 = vmatprep.subr.bf16.mxu0 0
    %106 = vmatpush1.bf16.msra.mxu0 0
    %107 = vmatprep.subr.bf16.mxu0 0
    %108 = vmatpush1.bf16.msra.mxu0 0
    %109 = vmatprep.subr.bf16.mxu0 0
    %110 = vmatpush1.bf16.msra.mxu0 0
    %111 = vmatprep.subr.bf16.mxu0 0
    %112 = vmatpush1.bf16.msra.mxu0 0
    %113 = vmatprep.subr.bf16.mxu0 0
    %114 = vmatpush1.bf16.msra.mxu0 0
    %115 = vmatprep.subr.bf16.mxu0 0
    %116 = vmatpush1.bf16.msra.mxu0 0
    %117 = vmatprep.subr.bf16.mxu0 0
    %118 = vmatpush1.bf16.msra.mxu0 0
    %119 = vmatprep.subr.bf16.mxu0 0
    %120 = vmatpush1.bf16.msra.mxu0 0
    %121 = vmatprep.mubr.bf16.mxu0 0
    %122 = vmatmul.mubr.bf16.gmra.mrb[0].mxu0 %v84
    %v123 = vpop.f32.mrb[0].mxu0
    %v124 = vadd.f32 0.0, %v123
    %v125 = vpop.f32.mrb[0].mxu0
    %v126 = vpop.f32.mrb[0].mxu0
    %v127 = vadd.f32 0.0, %v126
    %v128 = vpop.f32.mrb[0].mxu0
    %129 = vmatprep.mubr.bf16.mxu0 0
    %130 = vmatmul.mubr.bf16.gmra.mrb[0].mxu0 %v87
    %v131 = vpop.f32.mrb[0].mxu0
    %v132 = vadd.f32 0.0, %v131
    %v133 = vpop.f32.mrb[0].mxu0
    %v134 = vpop.f32.mrb[0].mxu0
    %v135 = vadd.f32 0.0, %v134
    %v136 = vpop.f32.mrb[0].mxu0
    %137 = vdwg.mxu0
    %v138 = vld [vmem:[#allocation7] sm:$0xff]
    %v139 = vld [vmem:[#allocation7 + $0x8] sm:$0xff]
    %v140 = vld [vmem:[#allocation7 + $0x10] sm:$0xff]
    %v141 = vld [vmem:[#allocation7 + $0x18] sm:$0xff]
    %v142 = vld [vmem:[#allocation7 + $0x20] sm:$0xff]
    %v143 = vld [vmem:[#allocation7 + $0x28] sm:$0xff]
    %v144 = vld [vmem:[#allocation7 + $0x30] sm:$0xff]
    %v145 = vld [vmem:[#allocation7 + $0x38] sm:$0xff]
    %v146 = vld [vmem:[#allocation7 + $0x40] sm:$0xff]
    %v147 = vld [vmem:[#allocation7 + $0x48] sm:$0xff]
    %v148 = vld [vmem:[#allocation7 + $0x50] sm:$0xff]
    %v149 = vld [vmem:[#allocation7 + $0x58] sm:$0xff]
    %v150 = vld [vmem:[#allocation7 + $0x60] sm:$0xff]
    %v151 = vld [vmem:[#allocation7 + $0x68] sm:$0xff]
    %v152 = vld [vmem:[#allocation7 + $0x70] sm:$0xff]
    %v153 = vld [vmem:[#allocation7 + $0x78] sm:$0xff]
    %154 = vmatprep.subr.mxu0 0.0
    %155 = vmatpush1.msra.mxu0 %v138
    %156 = vmatprep.subr.mxu0 0.0
    %157 = vmatpush1.msra.mxu0 %v139
    %158 = vmatprep.subr.mxu0 0.0
    %159 = vmatpush1.msra.mxu0 %v140
    %160 = vmatprep.subr.mxu0 0.0
    %161 = vmatpush1.msra.mxu0 %v141
    %162 = vmatprep.subr.mxu0 0.0
    %163 = vmatpush1.msra.mxu0 %v142
    %164 = vmatprep.subr.mxu0 0.0
    %165 = vmatpush1.msra.mxu0 %v143
    %166 = vmatprep.subr.mxu0 0.0
    %167 = vmatpush1.msra.mxu0 %v144
    %168 = vmatprep.subr.mxu0 0.0
    %169 = vmatpush1.msra.mxu0 %v145
    %170 = vmatprep.subr.mxu0 0.0
    %171 = vmatpush1.msra.mxu0 %v146
    %172 = vmatprep.subr.mxu0 0.0
    %173 = vmatpush1.msra.mxu0 %v147
    %174 = vmatprep.subr.mxu0 0.0
    %175 = vmatpush1.msra.mxu0 %v148
    %176 = vmatprep.subr.mxu0 0.0
    %177 = vmatpush1.msra.mxu0 %v149
    %178 = vmatprep.subr.mxu0 0.0
    %179 = vmatpush1.msra.mxu0 %v150
    %180 = vmatprep.subr.mxu0 0.0
    %181 = vmatpush1.msra.mxu0 %v151
    %182 = vmatprep.subr.mxu0 0.0
    %183 = vmatpush1.msra.mxu0 %v152
    %184 = vmatprep.subr.mxu0 0.0
    %185 = vmatpush1.msra.mxu0 %v153
    %186 = vmatprep.subr.mxu0 0.0
    %187 = vmatpush1.msra.mxu0 0.0
    %188 = vmatprep.subr.mxu0 0.0
    %189 = vmatpush1.msra.mxu0 0.0
    %190 = vmatprep.subr.mxu0 0.0
    %191 = vmatpush1.msra.mxu0 0.0
    %192 = vmatprep.subr.mxu0 0.0
    %193 = vmatpush1.msra.mxu0 0.0
    %194 = vmatprep.subr.mxu0 0.0
    %195 = vmatpush1.msra.mxu0 0.0
    %196 = vmatprep.subr.mxu0 0.0
    %197 = vmatpush1.msra.mxu0 0.0
    %198 = vmatprep.subr.mxu0 0.0
    %199 = vmatpush1.msra.mxu0 0.0
    %200 = vmatprep.subr.mxu0 0.0
    %201 = vmatpush1.msra.mxu0 0.0
    %202 = vmatprep.subr.mxu0 0.0
    %203 = vmatpush1.msra.mxu0 0.0
    %204 = vmatprep.subr.mxu0 0.0
    %205 = vmatpush1.msra.mxu0 0.0
    %206 = vmatprep.subr.mxu0 0.0
    %207 = vmatpush1.msra.mxu0 0.0
    %208 = vmatprep.subr.mxu0 0.0
    %209 = vmatpush1.msra.mxu0 0.0
    %210 = vmatprep.subr.mxu0 0.0
    %211 = vmatpush1.msra.mxu0 0.0
    %212 = vmatprep.subr.mxu0 0.0
    %213 = vmatpush1.msra.mxu0 0.0
    %214 = vmatprep.subr.mxu0 0.0
    %215 = vmatpush1.msra.mxu0 0.0
    %216 = vmatprep.subr.mxu0 0.0
    %217 = vmatpush1.msra.mxu0 0.0
    %218 = vmatprep.mubr.f32.mxu0 0.0
    %219 = vmatmul.mubr.f32.gmra.mrb[0].mxu0 %v124
    %v220 = vpop.f32.mrb[0].mxu0
    %v221 = vadd.f32 0.0, %v220
    %v222 = vpop.f32.mrb[0].mxu0
    %223 = vmatprep.mubr.f32.mxu0 0.0
    %224 = vmatmul.mubr.f32.gmra.mrb[0].mxu0 %v127
    %v225 = vpop.f32.mrb[0].mxu0
    %v226 = vadd.f32 0.0, %v225
    %v227 = vpop.f32.mrb[0].mxu0
    %228 = vmatprep.mubr.f32.mxu0 0.0
    %229 = vmatmul.mubr.f32.gmra.mrb[0].mxu0 %v132
    %v230 = vpop.f32.mrb[0].mxu0
    %v231 = vadd.f32 0.0, %v230
    %v232 = vpop.f32.mrb[0].mxu0
    %233 = vmatprep.mubr.f32.mxu0 0.0
    %234 = vmatmul.mubr.f32.gmra.mrb[0].mxu0 %v135
    %v235 = vpop.f32.mrb[0].mxu0
    %v236 = vadd.f32 0.0, %v235
    %v237 = vpop.f32.mrb[0].mxu0
    %238 = vdwg.mxu0
    %v239 = vpack.c.bf16 %v127, %v124
    %v240 = vpack.c.bf16 %v135, %v132
    %v243 = vunpack.c.l.b16 %v239
    %v244 = vunpack.c.h.b16 %v239
    %v245 = vunpack.c.l.b16 %v240
    %v246 = vunpack.c.h.b16 %v240
    %v247 = vpack.c.b16 %v243, %v243
    %v248 = vpack.c.b16 %v244, %v244
    %v249 = vpack.c.b16 %v245, %v245
    %v250 = vpack.c.b16 %v246, %v246
    %255 = vst [vmem:[#allocation8] sm:$0xf] %v247
    %256 = vst [vmem:[#allocation8 + $0x4] sm:$0xf] %v248
    %257 = vst [vmem:[#allocation8 + $0x8] sm:$0xf] %v249
    %258 = vst [vmem:[#allocation8 + $0xc] sm:$0xf] %v250
    %vm259 = vcmask 15360
    %260 = vst.msk [vmem:[#allocation9] sm:$0xff] %vm259, %v221
    %261 = vst.msk [vmem:[#allocation9 + $0x8] sm:$0xff] %vm259, %v226
    %262 = vst.msk [vmem:[#allocation9 + $0x10] sm:$0xff] %vm259, %v231
    %263 = vst.msk [vmem:[#allocation9 + $0x18] sm:$0xff] %vm259, %v236
    // Predicated region
    $region26: #{tpu_custom_call.1} parent=1 // pred_check
      _
    $region27: #{tpu_custom_call.1} parent=1 // pred_check_branch
      %265 = sbr.rel (0) target = $region29
    $region28: #{tpu_custom_call.1} parent=1 // pred_region
      %s267 = ssub.s32 256, 256
      %268 = vsyncadd [#allocation4], %s267
      %s269 = sshll.u32 [#allocation8], 4
      %s270 = int_to_ptr.vmem [resolvable:$true] %s269
      %275 = dma.vmem_to_hbm [thread:$0]  %s270, 256, %s3, [#allocation4], 64, 64, 4
    $region29: #{tpu_custom_call.1} parent=1 // pred_fallthru
      _
    // Predicated region
    $region30: #{tpu_custom_call.1} parent=1 // pred_check
      _
    $region31: #{tpu_custom_call.1} parent=1 // pred_check_branch
      %277 = sbr.rel (0) target = $region33
    $region32: #{tpu_custom_call.1} parent=1 // pred_region
      %s279 = ssub.s32 512, 512
      %280 = vsyncadd [#allocation10], %s279
      %s281 = sshll.u32 [#allocation9], 4
      %s282 = int_to_ptr.vmem [resolvable:$true] %s281
      %287 = dma.vmem_to_hbm [thread:$0]  %s282, 512, %s4, [#allocation10], 128, 128, 8
    $region33: #{tpu_custom_call.1} parent=1 // pred_fallthru
      _
    // Predicated region
    $region34: #{tpu_custom_call.1} parent=1 // pred_check
      _
    $region35: #{tpu_custom_call.1} parent=1 // pred_check_branch
      %289 = sbr.rel (0) target = $region37
    $region36: #{tpu_custom_call.1} parent=1 // pred_region
      %290 = dma.done [#allocation4], 256
    $region37: #{tpu_custom_call.1} parent=1 // pred_fallthru
      _
    // Predicated region
    $region38: #{tpu_custom_call.1} parent=1 // pred_check
      _
    $region39: #{tpu_custom_call.1} parent=1 // pred_check_branch
      %292 = sbr.rel (0) target = $region41
    $region40: #{tpu_custom_call.1} parent=1 // pred_region
      %293 = dma.done [#allocation10], 512
    $region41: #{tpu_custom_call.1} parent=1 // pred_fallthru
      _
    %294 = vsyncpa [#allocation3], 1
    %295 = vsyncpa [#allocation6], 1
    %296 = vsyncpa [#allocation4], 1
    %297 = vsyncpa [#allocation10], 1

</llo_original>
